<compile_context>
chip_gen: v5e
topology: v5e:2x2
jax: 0.10.0
libtpu: 0.0.40
codegen_flags: <defaults>
</compile_context>

<pallas_src>
import functools

import numpy as np
import jax
import jax.numpy as jnp
from jax.experimental import pallas as pl
from jax.experimental.pallas import tpu as pltpu

LANES = 128
SUBLANES = 8
MAX_TILE_ROWS = 2048   # 2048*128*4B = 1 MiB per input tile


def _static_pow(x, p):
    """x ** p; non-negative integer p uses multiply-only binary exponentiation."""
    pi = int(round(p))
    if abs(p - pi) < 1e-12 and pi >= 0:
        result = jnp.ones_like(x)
        base = x
        e = pi
        while e > 0:
            if e & 1:
                result = result * base
            base = base * base
            e >>= 1
        return result
    return x ** p


def _focal_loss_kernel(o_ref, t_ref, out_ref, acc_ref, *,
                       inv_n, focusing_param, balance_param):
    i = pl.program_id(0)

    @pl.when(i == 0)
    def _init():
        acc_ref[...] = jnp.zeros_like(acc_ref)

    # DMA happens in the native dtype; compute in f32 (v5e VPU has no bf16 ALU).
    o = o_ref[...].astype(jnp.float32)
    t = t_ref[...].astype(jnp.float32)

    # binary_cross_entropy element term; PyTorch clamps each log term at -100.
    #   -bce_elem = t*log(o) + (1-t)*log(1-o) = t*(log(o) - log(1-o)) + log(1-o)
    log_o = jnp.maximum(jnp.log(o), -100.0)
    log_1mo = jnp.maximum(jnp.log1p(-o), -100.0)
    neg_bce = t * (log_o - log_1mo) + log_1mo        # (tile_rows, 128)

    # Fold the tile to one (8, 128) vreg with VPU adds only; the XLU reduction
    # and all scalar focal math happen exactly once in the finalize step.
    acc_ref[...] += jnp.sum(neg_bce.reshape(-1, SUBLANES, LANES), axis=0)

    @pl.when(i == pl.num_programs(0) - 1)
    def _finalize():
        logpt = jnp.sum(acc_ref[...], keepdims=True) * inv_n   # (1,1) = -mean(BCE)
        pt = jnp.exp(logpt)
        focal = -_static_pow(1.0 - pt, focusing_param) * logpt
        out_ref[...] = balance_param * focal


def focal_loss(output, target, focusing_param=2.0, balance_param=0.25):
    """Pallas TPU implementation of FocalLoss.forward(output, target).

    `output` must hold probabilities in [0, 1], matching F.binary_cross_entropy.
    """
    output = jnp.asarray(output)
    target = jnp.asarray(target)
    assert output.shape == target.shape, "output/target shapes must match"
    n = int(np.prod(output.shape))
    assert n > 0

    # Lane-dense (rows, 128) layout, rows padded to a multiple of 8 sublanes.
    rows = -(-n // LANES)
    rows = -(-rows // SUBLANES) * SUBLANES
    if rows > MAX_TILE_ROWS:
        tile_rows = MAX_TILE_ROWS
        rows = -(-rows // tile_rows) * tile_rows
    else:
        tile_rows = rows                  # single block == full array dims
    padded_n = rows * LANES

    def _to_2d(x, pad_value):
        x = x.reshape(-1)
        if padded_n > n:
            x = jnp.concatenate(
                [x, jnp.full((padded_n - n,), pad_value, dtype=x.dtype)])
        return x.reshape(rows, LANES)

    # Padding with (output=1, target=1): t*(log(o)-log(1-o)) + log(1-o)
    #   = 1*(0 - (-100)) + (-100) = 0, so padded elements contribute nothing.
    o2d = _to_2d(output, 1.0)
    t2d = _to_2d(target, 1.0)

    kernel = functools.partial(
        _focal_loss_kernel,
        inv_n=1.0 / float(n),
        focusing_param=float(focusing_param),
        balance_param=float(balance_param),
    )

    out = pl.pallas_call(
        kernel,
        out_shape=jax.ShapeDtypeStruct((1, 1), jnp.float32),
        grid_spec=pltpu.PrefetchScalarGridSpec(
            num_scalar_prefetch=0,
            grid=(rows // tile_rows,),
            in_specs=[
                pl.BlockSpec((tile_rows, LANES), lambda i: (i, 0)),
                pl.BlockSpec((tile_rows, LANES), lambda i: (i, 0)),
            ],
            out_specs=pl.BlockSpec((1, 1), lambda i: (0, 0)),
            scratch_shapes=[pltpu.VMEM((SUBLANES, LANES), jnp.float32)],
        ),
        compiler_params=pltpu.CompilerParams(
            dimension_semantics=("arbitrary",)),  # output accumulates across the grid
    )(o2d, t2d)
    return out[0, 0]


def _reference_focal(output, target, focusing_param=2.0, balance_param=0.25):
    """NumPy reference mirroring the PyTorch FocalLoss forward."""
    o = np.asarray(output, np.float64)
    t = np.asarray(target, np.float64)
    with np.errstate(divide="ignore"):
        log_o = np.maximum(np.log(o), -100.0)
        log_1mo = np.maximum(np.log1p(-o), -100.0)
    bce = np.mean(-(t * log_o + (1.0 - t) * log_1mo))
    logpt = -bce
    pt = np.exp(logpt)
    focal = -((1.0 - pt) ** focusing_param) * logpt
    return balance_param * focal


if __name__ == "__main__":
    B, C = 8, 32   # small [batch, class] probabilities + binary targets
    key = jax.random.PRNGKey(0)
    k_out, k_tgt = jax.random.split(key)
    output = jax.random.uniform(k_out, (B, C), dtype=jnp.float32)            # probs in [0,1)
    target = jax.random.bernoulli(k_tgt, 0.5, (B, C)).astype(jnp.float32)    # binary targets

    loss = focal_loss(output, target)
    jax.block_until_ready(loss)

    ref = _reference_focal(np.asarray(output), np.asarray(target))
    np.testing.assert_allclose(np.asarray(loss), ref, rtol=2e-3, atol=2e-3)

    print("KERNEL_OK")
</pallas_src>

<mosaic_0001>
module attributes {stable_mosaic.version = 11 : i64} {
  func.func @_focal_loss_kernel(%arg0: i32, %arg1: memref<8x128xf32, #tpu.memory_space<vmem>>, %arg2: memref<8x128xf32, #tpu.memory_space<vmem>>, %arg3: memref<1x1xf32, #tpu.memory_space<vmem>>, %arg4: memref<8x128xf32, #tpu.memory_space<vmem>>) attributes {dimension_semantics = [#tpu.dimension_semantics<arbitrary>], iteration_bounds = array<i64: 1>, scalar_prefetch = 0 : i64, scratch_operands = 1 : i64, tpu.core_type = #tpu.core_type<tc>, window_params = [{transform_indices = @transform_0, window_bounds = array<i64: 8, 128>}, {transform_indices = @transform_1, window_bounds = array<i64: 8, 128>}, {pipeline_mode = #tpu.pipeline_mode<synchronous>, transform_indices = @transform_2, window_bounds = array<i64: 1, 1>}]} {
    %c0_i32 = arith.constant 0 : i32
    %0 = arith.cmpi eq, %arg0, %c0_i32 : i32
    %1 = arith.extui %0 : i1 to i32
    %c0_i32_0 = arith.constant 0 : i32
    %2 = arith.cmpi ne, %1, %c0_i32_0 : i32
    scf.if %2 {
      %cst_13 = arith.constant 0.000000e+00 : f32
      %24 = vector.broadcast %cst_13 : f32 to vector<8x128xf32>
      %c0_14 = arith.constant 0 : index
      %c0_15 = arith.constant 0 : index
      %25 = vector.load %arg4[%c0_14, %c0_15] : memref<8x128xf32, #tpu.memory_space<vmem>>, vector<8x128xf32>
      tpu.vector_store %arg4[%c0_14, %c0_15], %24 {strides = array<i32>} : memref<8x128xf32, #tpu.memory_space<vmem>>, vector<8x128xf32>,
    } else {
    }
    %c0 = arith.constant 0 : index
    %c0_1 = arith.constant 0 : index
    %3 = vector.load %arg1[%c0, %c0_1] : memref<8x128xf32, #tpu.memory_space<vmem>>, vector<8x128xf32>
    %c0_2 = arith.constant 0 : index
    %c0_3 = arith.constant 0 : index
    %4 = vector.load %arg2[%c0_2, %c0_3] : memref<8x128xf32, #tpu.memory_space<vmem>>, vector<8x128xf32>
    %5 = math.log %3 : vector<8x128xf32>
    %cst = arith.constant -1.000000e+02 : f32
    %6 = vector.broadcast %cst : f32 to vector<8x128xf32>
    %7 = arith.maximumf %5, %6 : vector<8x128xf32>
    %cst_4 = arith.constant 0.000000e+00 : f32
    %8 = vector.broadcast %cst_4 : f32 to vector<8x128xf32>
    %9 = arith.subf %8, %3 : vector<8x128xf32>
    %10 = math.log1p %9 : vector<8x128xf32>
    %cst_5 = arith.constant -1.000000e+02 : f32
    %11 = vector.broadcast %cst_5 : f32 to vector<8x128xf32>
    %12 = arith.maximumf %10, %11 : vector<8x128xf32>
    %13 = arith.subf %7, %12 : vector<8x128xf32>
    %14 = arith.mulf %4, %13 : vector<8x128xf32>
    %15 = arith.addf %14, %12 : vector<8x128xf32>
    %c0_6 = arith.constant 0 : index
    %c0_7 = arith.constant 0 : index
    %16 = vector.load %arg4[%c0_6, %c0_7] : memref<8x128xf32, #tpu.memory_space<vmem>>, vector<8x128xf32>
    %17 = vector.shape_cast %15 : vector<8x128xf32> to vector<1x8x128xf32>
    %cst_8 = arith.constant dense<0.000000e+00> : vector<8x128xf32>
    %18 = vector.multi_reduction <add>, %17, %cst_8 [0] : vector<1x8x128xf32> to vector<8x128xf32>
    %19 = arith.addf %16, %18 : vector<8x128xf32>
    %c0_9 = arith.constant 0 : index
    %c0_10 = arith.constant 0 : index
    %20 = vector.load %arg4[%c0_9, %c0_10] : memref<8x128xf32, #tpu.memory_space<vmem>>, vector<8x128xf32>
    tpu.vector_store %arg4[%c0_9, %c0_10], %19 {strides = array<i32>} : memref<8x128xf32, #tpu.memory_space<vmem>>, vector<8x128xf32>,
    %c0_i32_11 = arith.constant 0 : i32
    %21 = arith.cmpi eq, %arg0, %c0_i32_11 : i32
    %22 = arith.extui %21 : i1 to i32
    %c0_i32_12 = arith.constant 0 : i32
    %23 = arith.cmpi ne, %22, %c0_i32_12 : i32
    scf.if %23 {
      %c0_13 = arith.constant 0 : index
      %c0_14 = arith.constant 0 : index
      %24 = vector.load %arg4[%c0_13, %c0_14] : memref<8x128xf32, #tpu.memory_space<vmem>>, vector<8x128xf32>
      %25 = vector.shape_cast %24 : vector<8x128xf32> to vector<1x8x128xf32>
      %cst_15 = arith.constant dense<0.000000e+00> : vector<1xf32>
      %26 = vector.multi_reduction <add>, %25, %cst_15 [1, 2] : vector<1x8x128xf32> to vector<1xf32>
      %27 = vector.shape_cast %26 : vector<1xf32> to vector<1x1x1xf32>
      %28 = vector.extract %27[0, 0, 0] : f32 from vector<1x1x1xf32>
      %29 = vector.broadcast %28 : f32 to vector<1x1xf32>
      %cst_16 = arith.constant 3.906250e-03 : f32
      %30 = vector.broadcast %cst_16 : f32 to vector<1x1xf32>
      %31 = arith.mulf %29, %30 : vector<1x1xf32>
      %32 = math.exp %31 : vector<1x1xf32>
      %cst_17 = arith.constant 1.000000e+00 : f32
      %33 = vector.broadcast %cst_17 : f32 to vector<1x1xf32>
      %34 = arith.subf %33, %32 : vector<1x1xf32>
      %cst_18 = arith.constant 1.000000e+00 : f32
      %35 = vector.broadcast %cst_18 : f32 to vector<1x1xf32>
      %36 = arith.mulf %34, %34 : vector<1x1xf32>
      %37 = arith.mulf %35, %36 : vector<1x1xf32>
      %cst_19 = arith.constant 0.000000e+00 : f32
      %38 = vector.broadcast %cst_19 : f32 to vector<1x1xf32>
      %39 = arith.subf %38, %37 : vector<1x1xf32>
      %40 = arith.mulf %39, %31 : vector<1x1xf32>
      %cst_20 = arith.constant 2.500000e-01 : f32
      %41 = vector.broadcast %cst_20 : f32 to vector<1x1xf32>
      %42 = arith.mulf %41, %40 : vector<1x1xf32>
      %c0_21 = arith.constant 0 : index
      %c0_22 = arith.constant 0 : index
      %43 = vector.load %arg3[%c0_21, %c0_22] : memref<1x1xf32, #tpu.memory_space<vmem>>, vector<1x1xf32>
      tpu.vector_store %arg3[%c0_21, %c0_22], %42 {strides = array<i32>} : memref<1x1xf32, #tpu.memory_space<vmem>>, vector<1x1xf32>,
    } else {
    }
    return
  }
  func.func @transform_0(%arg0: i32) -> (i32, i32) {
    %c0_i32 = arith.constant 0 : i32
    %c0_i32_0 = arith.constant 0 : i32
    return %arg0, %c0_i32 : i32, i32
  }
  func.func @transform_1(%arg0: i32) -> (i32, i32) {
    %c0_i32 = arith.constant 0 : i32
    %c0_i32_0 = arith.constant 0 : i32
    return %arg0, %c0_i32 : i32, i32
  }
  func.func @transform_2(%arg0: i32) -> (i32, i32) {
    %c0_i32 = arith.constant 0 : i32
    %c0_i32_0 = arith.constant 0 : i32
    %c0_i32_1 = arith.constant 0 : i32
    return %c0_i32, %c0_i32_0 : i32, i32
  }
}

</mosaic_0001>

<llo_original>
// kernel: tpu_custom_call.1
$region0: #{tpu_custom_call.1}
  #allocation0 [shape = 'u32[]', space=smem, size = 0x4, offset = 0x4, fixed_abs, tag = 'smem constant byte address 0x4 - core index']
  #allocation1 [shape = 'u32[72,128]{1,0:T(1,128)}', space=vmem, size = 0x9000, scoped, tag = 'internal scratch']
  #allocation2 [shape = 'f32[8,128]{1,0:T(8,128)}', space=vmem, size = 0x1000, scoped, tag = 'scratch operand']
  %s0 = inlined_call_operand.hbm [shape: f32[8,128], index: 0, kind: input, shape index: {}]
  %s1 = inlined_call_operand.hbm [shape: f32[8,128], index: 1, kind: input, shape index: {}]
  %s2 = inlined_call_operand.hbm [shape: f32[1,1], index: 2, kind: output, shape index: {}]
  %s3 = sld [smem:[#allocation0]]
  $region34: #{tpu_custom_call.1} parent=0
    _
  %s5 = ssub.s32 1, %s3
  %s6 = scalar_select 0, %s5, %s3
  $region1: #{tpu_custom_call.1} parent=0
    #allocation3 [shape = 'u8[4096]{0}', space=vmem, size = 0x1000, scoped, tag = 'input window, operand 0, single buffered']
    #allocation4 [shape = 's32[1]{0}', space=sflag, size = 0x4, scoped, tag = 'scoped memory for tpu_custom_call.1']
    #allocation5 [shape = 's32[1]{0}', space=sflag, size = 0x4, scoped, tag = 'scoped memory for tpu_custom_call.1']
    #allocation6 [shape = 'u8[4096]{0}', space=vmem, size = 0x1000, scoped, tag = 'input window, operand 1, single buffered']
    #allocation7 [shape = 's32[1]{0}', space=sflag, size = 0x4, scoped, tag = 'scoped memory for tpu_custom_call.1']
    #allocation8 [shape = 'u8[512]{0}', space=vmem, size = 0x400, scoped, tag = 'output window, operand 0, single buffered']
    %7 = vsyncpa [#allocation4], 0
    %8 = vsyncpa [#allocation7], 0
    %9 = vsyncpa [#allocation5], 0
    // Predicated region
    $region2: #{tpu_custom_call.1} parent=1 // pred_check
      _
    $region3: #{tpu_custom_call.1} parent=1 // pred_check_branch
      %11 = sbr.rel (0) target = $region5
    $region4: #{tpu_custom_call.1} parent=1 // pred_region
      %13 = vsyncadd [#allocation4], 0
      %s15 = sshll.u32 %s0, 4
      %s16 = int_to_ptr.hbm [resolvable:$true] %s15
      %s17 = sshll.u32 [#allocation3], 4
      %s18 = int_to_ptr.vmem [resolvable:$true] %s17
      %20 = dma.hbm_to_vmem [thread:$0]  %s16, 128, %s18, [#allocation4]
    $region5: #{tpu_custom_call.1} parent=1 // pred_fallthru
      _
    // Predicated region
    $region6: #{tpu_custom_call.1} parent=1 // pred_check
      _
    $region7: #{tpu_custom_call.1} parent=1 // pred_check_branch
      %22 = sbr.rel (0) target = $region9
    $region8: #{tpu_custom_call.1} parent=1 // pred_region
      %24 = vsyncadd [#allocation7], 0
      %s26 = sshll.u32 %s1, 4
      %s27 = int_to_ptr.hbm [resolvable:$true] %s26
      %s28 = sshll.u32 [#allocation6], 4
      %s29 = int_to_ptr.vmem [resolvable:$true] %s28
      %31 = dma.hbm_to_vmem [thread:$0]  %s27, 128, %s29, [#allocation7]
    $region9: #{tpu_custom_call.1} parent=1 // pred_fallthru
      _
    // Predicated region
    $region10: #{tpu_custom_call.1} parent=1 // pred_check
      _
    $region11: #{tpu_custom_call.1} parent=1 // pred_check_branch
      %33 = sbr.rel (0) target = $region13
    $region12: #{tpu_custom_call.1} parent=1 // pred_region
      %35 = dma.done [#allocation4], 128
    $region13: #{tpu_custom_call.1} parent=1 // pred_fallthru
      _
    // Predicated region
    $region14: #{tpu_custom_call.1} parent=1 // pred_check
      _
    $region15: #{tpu_custom_call.1} parent=1 // pred_check_branch
      %37 = sbr.rel (0) target = $region17
    $region16: #{tpu_custom_call.1} parent=1 // pred_region
      %39 = dma.done [#allocation7], 128
    $region17: #{tpu_custom_call.1} parent=1 // pred_fallthru
      _
    %p40 = scmp.eq.s32.totalorder 0, 0
    // Predicated region
    $region18: #{tpu_custom_call.1} parent=1 // pred_check
      %p41 = pneg %p40
    $region19: #{tpu_custom_call.1} parent=1 // pred_check_branch
      %43 = sbr.rel (%p41) target = $region21
    $region20: #{tpu_custom_call.1} parent=1 // pred_region
      %44 = vst [vmem:[#allocation2] sm:$0xff] 0.0
    $region21: #{tpu_custom_call.1} parent=1 // pred_fallthru
      _
    %v45 = vld [vmem:[#allocation3] sm:$0xff]
    %v46 = vld [vmem:[#allocation6] sm:$0xff]
    %v47 = vlog2.pop %v45
    %v48 = vmul.f32 %v47, 0.6931472
    %v49 = vmax.f32 %v48, -100.0
    %v50 = vsub.f32 0.0, %v45
    %v51 = vadd.f32 %v50, 1.0
    %v52 = vlog2.pop %v51
    %v53 = vmul.f32 %v52, 0.6931472
    %v54 = vmul.f32 -0.5, %v50
    %v55 = vadd.f32 %v54, 1.0
    %v56 = vmul.f32 %v55, %v50
    %v57 = vand.u32 2147483647, %v50
    %vm58 = vcmp.lt.f32.partialorder %v57, 0.0004427343
    %v59 = vsel %vm58, %v56, %v53
    %v60 = vmax.f32 %v59, -100.0
    %v61 = vsub.f32 %v49, %v60
    %v62 = vmul.f32 %v46, %v61
    %v63 = vadd.f32 %v62, %v60
    %v64 = vld [vmem:[#allocation2] sm:$0xff]
    %v65 = vadd.f32 %v63, 0.0
    %v66 = vadd.f32 %v64, %v65
    %67 = vst [vmem:[#allocation2] sm:$0xff] %v66
    // Predicated region
    $region22: #{tpu_custom_call.1} parent=1 // pred_check
      %p68 = pneg %p40
    $region23: #{tpu_custom_call.1} parent=1 // pred_check_branch
      %70 = sbr.rel (%p68) target = $region25
    $region24: #{tpu_custom_call.1} parent=1 // pred_region
      %v71 = vld [vmem:[#allocation2] sm:$0xff]
      %72 = vadd.xlane.f32.xlu0 %v71
      %v73 = vpop.xlane.xlu0 %72
      %v74 = vrot.slane %v73, 4
      %v75 = vadd.f32 %v73, %v74
      %v76 = vrot.slane %v75, 2
      %v77 = vadd.f32 %v75, %v76
      %v78 = vrot.slane %v77, 1
      %v79 = vadd.f32 %v77, %v78
      %s80 = vtos %v79
      %v81 = vstv %s80
      %v82 = vmul.f32 %v81, 0.00390625
      %v83 = vmul.f32 %v82, 1.442695
      %v84 = vpow.pop %v83
      %v85 = vsub.f32 1.0, %v84
      %v86 = vmul.f32 %v85, %v85
      %v87 = vsub.f32 0.0, %v86
      %v88 = vmul.f32 %v87, %v82
      %v89 = vmul.f32 %v88, 0.25
      %vm90 = vcmask 0
      %91 = vst.msk [vmem:[#allocation8] sm:$0x1] %vm90, %v89
    $region25: #{tpu_custom_call.1} parent=1 // pred_fallthru
      _
    // Predicated region
    $region26: #{tpu_custom_call.1} parent=1 // pred_check
      _
    $region27: #{tpu_custom_call.1} parent=1 // pred_check_branch
      %93 = sbr.rel (0) target = $region29
    $region28: #{tpu_custom_call.1} parent=1 // pred_region
      %95 = vsyncadd [#allocation5], 0
      %s97 = sshll.u32 [#allocation8], 4
      %s98 = int_to_ptr.vmem [resolvable:$true] %s97
      %s99 = sshll.u32 %s2, 4
      %s100 = int_to_ptr.hbm [resolvable:$true] %s99
      %102 = dma.vmem_to_hbm [thread:$0]  %s98, 16, %s100, [#allocation5]
    $region29: #{tpu_custom_call.1} parent=1 // pred_fallthru
      _
    // Predicated region
    $region30: #{tpu_custom_call.1} parent=1 // pred_check
      _
    $region31: #{tpu_custom_call.1} parent=1 // pred_check_branch
      %104 = sbr.rel (0) target = $region33
    $region32: #{tpu_custom_call.1} parent=1 // pred_region
      %106 = dma.done [#allocation5], 16
    $region33: #{tpu_custom_call.1} parent=1 // pred_fallthru
      _
    %107 = vsyncpa [#allocation4], 1
    %108 = vsyncpa [#allocation7], 1
    %109 = vsyncpa [#allocation5], 1

</llo_original>
